<compile_context>
chip_gen: v5e
topology: v5e:2x2
jax: 0.10.0
libtpu: 0.0.40
codegen_flags: <defaults>
</compile_context>

<pallas_src>
import jax
import jax.numpy as jnp
from jax.experimental import pallas as pl
from jax.experimental.pallas import tpu as pltpu


def _codebook_kernel(x_ref, emb_ref, esq_ref, codes_ref, quant_ref):
    """One tile of rows against the full codebook.

    x_ref:     (TN, D)  float   - tile of flattened input vectors
    emb_ref:   (K,  D)  float32 - full codebook (embedding_sum / cluster_usage)
    esq_ref:   (1,  K)  float32 - precomputed |e_k|^2 (hoisted to wrapper)
    codes_ref: (1,  TN) int32   - argmin codes, lane-dense layout
    quant_ref: (TN, D)  float   - embedding[codes]
    """
    x = x_ref[...]                      # (TN, D), native dtype (bf16-friendly)
    emb = emb_ref[...]                  # (K, D), float32

    # Scoring matmul on the MXU: x . e_k^T with f32 accumulation.
    scores = jax.lax.dot_general(
        x, emb.astype(x.dtype),
        dimension_numbers=(((1,), (1,)), ((), ())),
        preferred_element_type=jnp.float32)                      # (TN, K)

    # argmin_k |x - e_k|^2 == argmin_k (|e_k|^2 - 2 x.e_k); |x|^2 dropped.
    d = esq_ref[...] - 2.0 * scores                              # (TN, K)

    codes = jnp.argmin(d, axis=-1).astype(jnp.int32)             # (TN,)
    codes_ref[...] = codes[None, :]                              # lane-dense store

    # Decode via one-hot matmul (gather-free, MXU friendly). Keeping the
    # codebook in f32 makes the decode exactly embedding[codes].
    k_iota = jax.lax.broadcasted_iota(jnp.int32, d.shape, 1)     # (TN, K)
    onehot = (k_iota == codes[:, None]).astype(jnp.float32)
    quant_ref[...] = jnp.dot(
        onehot, emb, preferred_element_type=jnp.float32).astype(quant_ref.dtype)


def euclidean_codebook_forward(x, embedding_sum, cluster_usage, *, epsilon=1e-5,
                               row_tile=None, vmem_limit_bytes=None):
    """Reproduces EuclideanCodebook.forward -> (quantized, codes, metrics={})."""
    orig_shape = x.shape
    dim = orig_shape[-1]
    codebook_size = embedding_sum.shape[0]

    # Glue (plain JAX): centroids exactly as the `embedding` property does.
    embedding = (embedding_sum /
                 jnp.maximum(cluster_usage, epsilon)[:, None]).astype(jnp.float32)
    # Hoisted codebook-side constant: |e_k|^2, shape (1, K).
    e_sq = jnp.sum(embedding * embedding, axis=-1)[None, :]

    # Flatten '... d -> (...) d'
    x_flat = x.reshape(-1, dim)
    n = x_flat.shape[0]

    # Row tile: large and lane-aligned by default, shrunk for tiny inputs and
    # clamped so the (row_tile x K) f32 intermediates stay well inside scoped
    # VMEM on every TPU generation (v7x has only 64 MiB / 32 MiB scoped).
    if row_tile is None:
        row_tile = 512
    row_tile = int(min(row_tile, max(8, pl.next_power_of_2(n))))
    while row_tile > 8 and 3 * row_tile * codebook_size * 4 > (12 << 20):
        row_tile //= 2

    num_tiles = pl.cdiv(n, row_tile)
    n_pad = num_tiles * row_tile
    if n_pad != n:
        x_flat = jnp.pad(x_flat, ((0, n_pad - n), (0, 0)))

    if vmem_limit_bytes is None:
        # Above the v5e 16 MiB scoped default, within physical VMEM everywhere.
        vmem_limit_bytes = 32 * 1024 * 1024

    itemsize = jnp.dtype(x.dtype).itemsize
    cost = pl.CostEstimate(
        flops=4 * n_pad * codebook_size * dim,        # scoring + one-hot decode
        transcendentals=0,
        bytes_accessed=(n_pad * dim * itemsize        # x in
                        + codebook_size * dim * 4     # codebook
                        + codebook_size * 4           # |e|^2
                        + n_pad * dim * itemsize      # quantized out
                        + n_pad * 4))                 # codes out

    codes_2d, quant_flat = pl.pallas_call(
        _codebook_kernel,
        out_shape=(
            jax.ShapeDtypeStruct((num_tiles, row_tile), jnp.int32),  # lane-dense codes
            jax.ShapeDtypeStruct((n_pad, dim), x.dtype),
        ),
        grid_spec=pltpu.PrefetchScalarGridSpec(
            num_scalar_prefetch=0,
            grid=(num_tiles,),
            in_specs=[
                pl.BlockSpec((row_tile, dim), lambda i: (i, 0)),        # x tile
                pl.BlockSpec((codebook_size, dim), lambda i: (0, 0)),   # full codebook
                pl.BlockSpec((1, codebook_size), lambda i: (0, 0)),     # |e|^2
            ],
            out_specs=[
                pl.BlockSpec((1, row_tile), lambda i: (i, 0)),          # codes
                pl.BlockSpec((row_tile, dim), lambda i: (i, 0)),        # quantized
            ],
        ),
        compiler_params=pltpu.CompilerParams(
            dimension_semantics=("parallel",),
            vmem_limit_bytes=vmem_limit_bytes),
        cost_estimate=cost,
    )(x_flat, embedding, e_sq)

    codes = codes_2d.reshape(-1)[:n].reshape(orig_shape[:-1])
    quantized = quant_flat[:n].reshape(orig_shape)
    metrics = {}
    return quantized, codes, metrics


if __name__ == "__main__":
    # Small shapes consistent with the module: x is [..., D] -> use [B, T, D].
    B, T, D = 2, 8, 32
    K = 64  # codebook_size

    key = jax.random.PRNGKey(0)
    kx, ke, ku = jax.random.split(key, 3)

    x = jax.random.normal(kx, (B, T, D), dtype=jnp.float32)
    # Deterministic synthetic buffers (module inits embedding_sum=zeros,
    # cluster_usage=ones; random embedding_sum so the kernel is exercised).
    embedding_sum = jax.random.normal(ke, (K, D), dtype=jnp.float32)
    cluster_usage = jnp.abs(jax.random.normal(ku, (K,), dtype=jnp.float32)) + 0.5

    quantized, codes, metrics = euclidean_codebook_forward(
        x, embedding_sum, cluster_usage, epsilon=1e-5)
    jax.block_until_ready((quantized, codes))

    # Cross-check against a plain-JAX reference of the same forward semantics.
    emb_ref = embedding_sum / jnp.maximum(cluster_usage, 1e-5)[:, None]
    xf = x.reshape(-1, D)
    d_ref = jnp.sum((xf[:, None, :] - emb_ref[None, :, :]) ** 2, axis=-1)
    codes_ref = jnp.argmin(d_ref, axis=-1).reshape(B, T)
    quant_ref = emb_ref[codes_ref]

    assert codes.shape == (B, T) and codes.dtype == jnp.int32
    assert quantized.shape == (B, T, D)
    assert bool(jnp.all(codes == codes_ref))
    assert bool(jnp.allclose(quantized, quant_ref, atol=1e-5, rtol=1e-5))
    assert metrics == {}

    print("KERNEL_OK")
</pallas_src>

<mosaic_0001>
module attributes {stable_mosaic.version = 11 : i64} {
  func.func @_codebook_kernel(%arg0: i32, %arg1: memref<16x32xf32, #tpu.memory_space<vmem>>, %arg2: memref<64x32xf32, #tpu.memory_space<vmem>>, %arg3: memref<1x64xf32, #tpu.memory_space<vmem>>, %arg4: memref<1x16xi32, #tpu.memory_space<vmem>>, %arg5: memref<16x32xf32, #tpu.memory_space<vmem>>) attributes {dimension_semantics = [#tpu.dimension_semantics<parallel>], iteration_bounds = array<i64: 1>, scalar_prefetch = 0 : i64, scratch_operands = 0 : i64, tpu.core_type = #tpu.core_type<tc>, window_params = [{transform_indices = @transform_0, window_bounds = array<i64: 16, 32>}, {pipeline_mode = #tpu.pipeline_mode<synchronous>, transform_indices = @transform_1, window_bounds = array<i64: 64, 32>}, {pipeline_mode = #tpu.pipeline_mode<synchronous>, transform_indices = @transform_2, window_bounds = array<i64: 1, 64>}, {transform_indices = @transform_3, window_bounds = array<i64: 1, 16>}, {transform_indices = @transform_4, window_bounds = array<i64: 16, 32>}]} {
    %c0 = arith.constant 0 : index
    %c0_0 = arith.constant 0 : index
    %0 = vector.load %arg1[%c0, %c0_0] : memref<16x32xf32, #tpu.memory_space<vmem>>, vector<16x32xf32>
    %c0_1 = arith.constant 0 : index
    %c0_2 = arith.constant 0 : index
    %1 = vector.load %arg2[%c0_1, %c0_2] : memref<64x32xf32, #tpu.memory_space<vmem>>, vector<64x32xf32>
    %cst = arith.constant dense<0.000000e+00> : vector<16x64xf32>
    %2 = tpu.matmul %0, %1, %cst {dimension_numbers = #tpu.dot_dimension_numbers<[1], [1], [0], [0], [0, 0, 1, 0], [], []>} : vector<16x32xf32>, vector<64x32xf32>, vector<16x64xf32> -> vector<16x64xf32>
    %c0_3 = arith.constant 0 : index
    %c0_4 = arith.constant 0 : index
    %3 = vector.load %arg3[%c0_3, %c0_4] : memref<1x64xf32, #tpu.memory_space<vmem>>, vector<1x64xf32>
    %cst_5 = arith.constant 2.000000e+00 : f32
    %4 = vector.broadcast %cst_5 : f32 to vector<16x64xf32>
    %5 = arith.mulf %4, %2 : vector<16x64xf32>
    %6 = vector.broadcast %3 : vector<1x64xf32> to vector<16x64xf32>
    %7 = arith.subf %6, %5 : vector<16x64xf32>
    %8 = tpu.reduce_index %7 {axis = 1 : i32, kind = #tpu.reduction_kind<arg_min>} : vector<16x64xf32> -> vector<16xi32>
    %9 = vector.shape_cast %8 : vector<16xi32> to vector<1x16xi32>
    %c0_6 = arith.constant 0 : index
    %c0_7 = arith.constant 0 : index
    %10 = vector.load %arg4[%c0_6, %c0_7] : memref<1x16xi32, #tpu.memory_space<vmem>>, vector<1x16xi32>
    tpu.vector_store %arg4[%c0_6, %c0_7], %9 {strides = array<i32>} : memref<1x16xi32, #tpu.memory_space<vmem>>, vector<1x16xi32>,
    %11 = tpu.iota {dimensions = array<i32: 1>} : vector<16x64xi32>
    %12 = vector.shape_cast %8 : vector<16xi32> to vector<16x1xi32>
    %13 = vector.broadcast %12 : vector<16x1xi32> to vector<16x64xi32>
    %14 = arith.cmpi eq, %11, %13 : vector<16x64xi32>
    %15 = arith.extui %14 : vector<16x64xi1> to vector<16x64xi32>
    %16 = arith.sitofp %15 : vector<16x64xi32> to vector<16x64xf32>
    %cst_8 = arith.constant dense<0.000000e+00> : vector<16x32xf32>
    %17 = tpu.matmul %16, %1, %cst_8 {dimension_numbers = #tpu.dot_dimension_numbers<[1], [0], [0], [1], [0, 0, 1, 1], [], []>} : vector<16x64xf32>, vector<64x32xf32>, vector<16x32xf32> -> vector<16x32xf32>
    %c0_9 = arith.constant 0 : index
    %c0_10 = arith.constant 0 : index
    %18 = vector.load %arg5[%c0_9, %c0_10] : memref<16x32xf32, #tpu.memory_space<vmem>>, vector<16x32xf32>
    tpu.vector_store %arg5[%c0_9, %c0_10], %17 {strides = array<i32>} : memref<16x32xf32, #tpu.memory_space<vmem>>, vector<16x32xf32>,
    return
  }
  func.func @transform_0(%arg0: i32) -> (i32, i32) {
    %c0_i32 = arith.constant 0 : i32
    %c0_i32_0 = arith.constant 0 : i32
    return %arg0, %c0_i32 : i32, i32
  }
  func.func @transform_1(%arg0: i32) -> (i32, i32) {
    %c0_i32 = arith.constant 0 : i32
    %c0_i32_0 = arith.constant 0 : i32
    %c0_i32_1 = arith.constant 0 : i32
    return %c0_i32, %c0_i32_0 : i32, i32
  }
  func.func @transform_2(%arg0: i32) -> (i32, i32) {
    %c0_i32 = arith.constant 0 : i32
    %c0_i32_0 = arith.constant 0 : i32
    %c0_i32_1 = arith.constant 0 : i32
    return %c0_i32, %c0_i32_0 : i32, i32
  }
  func.func @transform_3(%arg0: i32) -> (i32, i32) {
    %c0_i32 = arith.constant 0 : i32
    %c0_i32_0 = arith.constant 0 : i32
    return %arg0, %c0_i32 : i32, i32
  }
  func.func @transform_4(%arg0: i32) -> (i32, i32) {
    %c0_i32 = arith.constant 0 : i32
    %c0_i32_0 = arith.constant 0 : i32
    return %arg0, %c0_i32 : i32, i32
  }
}

</mosaic_0001>

<llo_original>
// kernel: tpu_custom_call.1
$region0: #{tpu_custom_call.1}
  #allocation0 [shape = 'u32[]', space=smem, size = 0x4, offset = 0x4, fixed_abs, tag = 'smem constant byte address 0x4 - core index']
  #allocation1 [shape = 'u32[72,128]{1,0:T(1,128)}', space=vmem, size = 0x9000, scoped, tag = 'internal scratch']
  %s0 = inlined_call_operand.vmem [shape: f32[16,32], index: 0, kind: input, shape index: {}]
  %s1 = inlined_call_operand.vmem [shape: f32[64,32], index: 1, kind: input, shape index: {}]
  %s2 = inlined_call_operand.vmem [shape: f32[1,64], index: 2, kind: input, shape index: {}]
  %s3 = inlined_call_operand.hbm [shape: s32[1,16], index: 3, kind: output, shape index: {0}]
  %s4 = inlined_call_operand.hbm [shape: f32[16,32], index: 4, kind: output, shape index: {1}]
  %5 = xla_tuple %s3, %s4
  %s6 = sld [smem:[#allocation0]]
  $region30: #{tpu_custom_call.1} parent=0
    _
  %s8 = ssub.s32 1, %s6
  %s9 = scalar_select 0, %s8, %s6
  $region1: #{tpu_custom_call.1} parent=0
    #allocation2 [shape = 'u8[512]{0}', space=vmem, size = 0x400, scoped, tag = 'output window, operand 0, single buffered']
    #allocation3 [shape = 's32[1]{0}', space=sflag, size = 0x4, scoped, tag = 'scoped memory for tpu_custom_call.1']
    #allocation4 [shape = 'u8[8192]{0}', space=vmem, size = 0x2000, scoped, tag = 'output window, operand 1, single buffered']
    #allocation5 [shape = 's32[1]{0}', space=sflag, size = 0x4, scoped, tag = 'scoped memory for tpu_custom_call.1']
    %10 = vsyncpa [#allocation3], 0
    %11 = vsyncpa [#allocation5], 0
    // Predicated region
    $region2: #{tpu_custom_call.1} parent=1 // pred_check
      _
    $region3: #{tpu_custom_call.1} parent=1 // pred_check_branch
      %13 = sbr.rel (0) target = $region5
    $region4: #{tpu_custom_call.1} parent=1 // pred_region
      _
    $region5: #{tpu_custom_call.1} parent=1 // pred_fallthru
      _
    // Predicated region
    $region6: #{tpu_custom_call.1} parent=1 // pred_check
      _
    $region7: #{tpu_custom_call.1} parent=1 // pred_check_branch
      %15 = sbr.rel (0) target = $region9
    $region8: #{tpu_custom_call.1} parent=1 // pred_region
      _
    $region9: #{tpu_custom_call.1} parent=1 // pred_fallthru
      _
    // Predicated region
    $region10: #{tpu_custom_call.1} parent=1 // pred_check
      _
    $region11: #{tpu_custom_call.1} parent=1 // pred_check_branch
      %17 = sbr.rel (0) target = $region13
    $region12: #{tpu_custom_call.1} parent=1 // pred_region
      _
    $region13: #{tpu_custom_call.1} parent=1 // pred_fallthru
      _
    %v18 = vld [vmem:[%s0] sm:$0xff]
    %v19 = vld [vmem:[%s0 + $0x8] sm:$0xff]
    %v20 = vld [vmem:[%s1] sm:$0xff]
    %v21 = vld [vmem:[%s1 + $0x8] sm:$0xff]
    %v22 = vld [vmem:[%s1 + $0x10] sm:$0xff]
    %v23 = vld [vmem:[%s1 + $0x18] sm:$0xff]
    %v24 = vld [vmem:[%s1 + $0x20] sm:$0xff]
    %v25 = vld [vmem:[%s1 + $0x28] sm:$0xff]
    %v26 = vld [vmem:[%s1 + $0x30] sm:$0xff]
    %v27 = vld [vmem:[%s1 + $0x38] sm:$0xff]
    %vm28 = vcmask 261120
    %v30 = vsel %vm28, %v18, 0
    %v33 = vsel %vm28, %v19, 0
    %v36 = vsel %vm28, %v20, 0
    %v39 = vsel %vm28, %v21, 0
    %v42 = vsel %vm28, %v22, 0
    %v45 = vsel %vm28, %v23, 0
    %v48 = vsel %vm28, %v24, 0
    %v51 = vsel %vm28, %v25, 0
    %v54 = vsel %vm28, %v26, 0
    %v57 = vsel %vm28, %v27, 0
    %59 = vmatpush.xpose.msra.mxu0 0.0
    %60 = vmatpush.xpose.msra.mxu0 0.0
    %61 = vmatpush.xpose.msra.mxu0 0.0
    %62 = vmatpush.xpose.msra.mxu0 0.0
    %63 = vmatpush.xpose.msra.mxu0 0.0
    %64 = vmatpush.xpose.msra.mxu0 0.0
    %65 = vmatpush.xpose.msra.mxu0 0.0
    %66 = vmatpush.xpose.msra.mxu0 0.0
    %67 = vmatpush.xpose.msra.mxu0 %v57
    %68 = vmatpush.xpose.msra.mxu0 %v54
    %69 = vmatpush.xpose.msra.mxu0 %v51
    %70 = vmatpush.xpose.msra.mxu0 %v48
    %71 = vmatpush.xpose.msra.mxu0 %v45
    %72 = vmatpush.xpose.msra.mxu0 %v42
    %73 = vmatpush.xpose.msra.mxu0 %v39
    %74 = vmatpush.xpose.msra.mxu0 %v36
    %75 = vmatmul.f32.gmra.mxu0 %v30
    %v76 = vpop.f32.mrf.mxu0
    %v77 = vadd.f32 0.0, %v76
    %78 = vmatmul.f32.gmra.mxu0 %v33
    %v79 = vpop.f32.mrf.mxu0
    %v80 = vadd.f32 0.0, %v79
    %81 = vdwg.mxu0
    %v82 = vld [vmem:[%s2] sm:$0x1]
    %v83 = vmul.f32 %v77, 2.0
    %v84 = vmul.f32 %v80, 2.0
    %v86 = vperm.slane %v82, 0
    %v88 = vsub.f32 %v86, %v83
    %v89 = vsub.f32 %v86, %v84
    %vm90 = vcmask 523264
    %v91 = vsel %vm90, %v88, inf
    %92 = vmin.index.xlane.f32.xlu0 %v91
    %v93 = vpop.xlane.xlu0 %92
    %v94 = vsel %vm90, %v89, inf
    %95 = vmin.index.xlane.f32.xlu0 %v94
    %v96 = vpop.xlane.xlu0 %95
    %v97 = vlaneseq
    %v98 = vand.u32 %v97, 127
    %v99 = vperm.slane %v93, %v98
    %v100 = vadd.s32 %v98, 4294967288
    %v101 = vperm.slane %v96, %v100
    %vm102 = vcmask 130112
    %v103 = vsel %vm102, %v101, %v99
    %vm104 = vcmask 122880
    %105 = vst.msk [vmem:[#allocation2] sm:$0x1] %vm104, %v103
    %vm106 = vcmp.eq.s32.totalorder %v98, %v93
    %vm107 = vcmp.eq.s32.totalorder %v98, %v96
    %v108 = vsel %vm106, 1, 0
    %v109 = vsel %vm107, 1, 0
    %v110 = vcvt.s32.f32 %v108
    %v111 = vcvt.s32.f32 %v109
    %v113 = vsel %vm90, %v110, 0
    %v116 = vsel %vm90, %v111, 0
    %118 = vmatpush.msra.mxu0 0.0
    %119 = vmatpush.msra.mxu0 0.0
    %120 = vmatpush.msra.mxu0 0.0
    %121 = vmatpush.msra.mxu0 0.0
    %122 = vmatpush.msra.mxu0 0.0
    %123 = vmatpush.msra.mxu0 0.0
    %124 = vmatpush.msra.mxu0 0.0
    %125 = vmatpush.msra.mxu0 0.0
    %126 = vmatpush.msra.mxu0 %v27
    %127 = vmatpush.msra.mxu0 %v26
    %128 = vmatpush.msra.mxu0 %v25
    %129 = vmatpush.msra.mxu0 %v24
    %130 = vmatpush.msra.mxu0 %v23
    %131 = vmatpush.msra.mxu0 %v22
    %132 = vmatpush.msra.mxu0 %v21
    %133 = vmatpush.msra.mxu0 %v20
    %134 = vmatmul.f32.gmra.mxu0 %v113
    %v135 = vpop.f32.mrf.mxu0
    %v136 = vadd.f32 0.0, %v135
    %137 = vmatmul.f32.gmra.mxu0 %v116
    %v138 = vpop.f32.mrf.mxu0
    %v139 = vadd.f32 0.0, %v138
    %140 = vdwg.mxu0
    %141 = vst.msk [vmem:[#allocation4] sm:$0xff] %vm28, %v136
    %142 = vst.msk [vmem:[#allocation4 + $0x8] sm:$0xff] %vm28, %v139
    // Predicated region
    $region14: #{tpu_custom_call.1} parent=1 // pred_check
      _
    $region15: #{tpu_custom_call.1} parent=1 // pred_check_branch
      %144 = sbr.rel (0) target = $region17
    $region16: #{tpu_custom_call.1} parent=1 // pred_region
      %146 = vsyncadd [#allocation3], 0
      %s148 = sshll.u32 [#allocation2], 4
      %s149 = int_to_ptr.vmem [resolvable:$true] %s148
      %s150 = sshll.u32 %s3, 4
      %s151 = int_to_ptr.hbm [resolvable:$true] %s150
      %153 = dma.vmem_to_hbm [thread:$0]  %s149, 16, %s151, [#allocation3]
    $region17: #{tpu_custom_call.1} parent=1 // pred_fallthru
      _
    // Predicated region
    $region18: #{tpu_custom_call.1} parent=1 // pred_check
      _
    $region19: #{tpu_custom_call.1} parent=1 // pred_check_branch
      %155 = sbr.rel (0) target = $region21
    $region20: #{tpu_custom_call.1} parent=1 // pred_region
      %157 = vsyncadd [#allocation5], 0
      %s158 = sshll.u32 [#allocation4], 4
      %s159 = int_to_ptr.vmem [resolvable:$true] %s158
      %s160 = sshll.u32 %s4, 4
      %s161 = int_to_ptr.hbm [resolvable:$true] %s160
      %166 = dma.vmem_to_hbm [thread:$0]  %s159, 256, %s161, [#allocation5], 128, 128, 8
    $region21: #{tpu_custom_call.1} parent=1 // pred_fallthru
      _
    // Predicated region
    $region22: #{tpu_custom_call.1} parent=1 // pred_check
      _
    $region23: #{tpu_custom_call.1} parent=1 // pred_check_branch
      %168 = sbr.rel (0) target = $region25
    $region24: #{tpu_custom_call.1} parent=1 // pred_region
      %170 = dma.done [#allocation3], 16
    $region25: #{tpu_custom_call.1} parent=1 // pred_fallthru
      _
    // Predicated region
    $region26: #{tpu_custom_call.1} parent=1 // pred_check
      _
    $region27: #{tpu_custom_call.1} parent=1 // pred_check_branch
      %172 = sbr.rel (0) target = $region29
    $region28: #{tpu_custom_call.1} parent=1 // pred_region
      %174 = dma.done [#allocation5], 256
    $region29: #{tpu_custom_call.1} parent=1 // pred_fallthru
      _
    %175 = vsyncpa [#allocation3], 1
    %176 = vsyncpa [#allocation5], 1

</llo_original>
